<compile_context>
chip_gen: v5e
topology: v5e:2x2
jax: 0.10.0
libtpu: 0.0.40
codegen_flags: <defaults>
</compile_context>

<pallas_src>
import jax
import jax.numpy as jnp
from jax import lax
from jax.experimental import pallas as pl
from jax.experimental.pallas import tpu as pltpu

N_EMBD = 32
N_HEAD = 2
HEAD_SIZE = N_EMBD // N_HEAD          # 16
HALF = HEAD_SIZE // 2                 # 8
A_W = N_HEAD * HALF                   # width of the "a"/"b" column blocks (= C//2)
LN_EPS = 1e-5
NEG_INF = -1e30   # large finite negative: same softmax result, no NaN risk


# ----------------------------- Pallas kernel -------------------------------

def _layer_norm(v, g, b):
    mu = jnp.mean(v, axis=-1, keepdims=True)
    var = jnp.mean((v - mu) ** 2, axis=-1, keepdims=True)
    return (v - mu) * lax.rsqrt(var + LN_EPS) * g + b


def _block_kernel(x_ref, wqkv_ref, wproj_ref, wf1_ref, wf2_ref,
                  vec_ref, bf1_ref, rope_ref, bias_ref, o_ref):
    xx = x_ref[...]                    # (R, C) f32 — batch folded into rows
    R, C = xx.shape

    vecs = vec_ref[...]                # (6, C) f32
    g1 = vecs[0:1]
    b1 = vecs[1:2]
    g2 = vecs[2:3]
    b2 = vecs[3:4]
    bproj = vecs[4:5]
    bf2 = vecs[5:6]

    # ---- self-attention branch: x + proj(concat_h attn_h(LN1(x))) ----
    h = _layer_norm(xx, g1, b1)                                  # (R, C) f32

    # fused QKV projection; columns = [q_a | q_b | k_a | k_b | v]
    # (a = "real" halves of both heads, b = "imag" halves; 1/sqrt(hs) folded
    #  into q columns offline)
    qkv = jnp.dot(h.astype(jnp.bfloat16), wqkv_ref[...],
                  preferred_element_type=jnp.float32)            # (R, 3C) f32
    qa = qkv[:, 0 * A_W:1 * A_W]
    qb = qkv[:, 1 * A_W:2 * A_W]
    ka = qkv[:, 2 * A_W:3 * A_W]
    kb = qkv[:, 3 * A_W:4 * A_W]
    v = qkv[:, 4 * A_W:]

    # RoPE — pure elementwise (no lane movement): cos/sin tables already in
    # the [head0 freqs | head1 freqs] layout, tiled over batch rows.
    cos = rope_ref[0]                  # (R, A_W) f32
    sin = rope_ref[1]
    qa2 = qa * cos - qb * sin
    qb2 = qb * cos + qa * sin
    ka2 = ka * cos - kb * sin
    kb2 = kb * cos + ka * sin

    bias = bias_ref[...]               # (R, R) additive block-diag causal mask

    dn = (((1,), (1,)), ((), ()))      # contract last dim with last dim (A·Bᵀ)
    sa = None
    for hd in range(N_HEAD):           # tiny 2-iteration loop: score/softmax/PV
        sl8 = slice(hd * HALF, (hd + 1) * HALF)
        sl16 = slice(hd * HEAD_SIZE, (hd + 1) * HEAD_SIZE)
        # score over all batches at once (cross-batch terms masked out below)
        s = lax.dot_general(qa2[:, sl8].astype(jnp.bfloat16),
                            ka2[:, sl8].astype(jnp.bfloat16),
                            dn, preferred_element_type=jnp.float32)
        s = s + lax.dot_general(qb2[:, sl8].astype(jnp.bfloat16),
                                kb2[:, sl8].astype(jnp.bfloat16),
                                dn, preferred_element_type=jnp.float32)
        s = s + bias                                            # (R, R)
        m = jnp.max(s, axis=-1, keepdims=True)
        e = jnp.exp(s - m)
        p = e * pl.reciprocal(jnp.sum(e, axis=-1, keepdims=True), approx=True)
        # (attention dropout omitted: identity)
        pv = jnp.dot(p.astype(jnp.bfloat16), v[:, sl16].astype(jnp.bfloat16),
                     preferred_element_type=jnp.float32)        # (R, hs)
        part = jnp.dot(pv.astype(jnp.bfloat16), wproj_ref[sl16, :],
                       preferred_element_type=jnp.float32)      # (R, C)
        sa = part if sa is None else sa + part                  # no head concat

    xx = xx + sa + bproj

    # ---- feed-forward branch: x + W2(relu(W1(LN2(x)))) ----
    h2 = _layer_norm(xx, g2, b2)
    f = jnp.dot(h2.astype(jnp.bfloat16), wf1_ref[...],
                preferred_element_type=jnp.float32) + bf1_ref[...]
    f = jnp.maximum(f, 0.0)
    y = xx + jnp.dot(f.astype(jnp.bfloat16), wf2_ref[...],
                     preferred_element_type=jnp.float32) + bf2

    o_ref[...] = y.astype(o_ref.dtype)


def block_forward(x, kp, *, batch_blocks=1):
    """batch_blocks=1 (v5e/v6e: one grid step, whole batch resident);
       batch_blocks=2 on v7x so the two parallel steps map to the two TCs."""
    B, T, C = x.shape
    assert C == N_EMBD and B % batch_blocks == 0
    Bb = B // batch_blocks
    R = Bb * T                          # rows per grid step (batch folded in)

    x2 = x.reshape(B * T, C)

    # additive block-diagonal causal mask (same for every batch block) — hoisted
    rr = jnp.arange(R, dtype=jnp.int32)
    same_batch = (rr[:, None] // T) == (rr[None, :] // T)
    causal = rr[None, :] <= rr[:, None]
    bias = jnp.where(same_batch & causal, 0.0, NEG_INF).astype(jnp.float32)

    out2 = pl.pallas_call(
        _block_kernel,
        out_shape=jax.ShapeDtypeStruct((B * T, C), x.dtype),
        grid=(batch_blocks,),
        in_specs=[
            pl.BlockSpec((R, C), lambda i: (i, 0)),                 # x rows
            pl.BlockSpec(kp['wqkv'].shape, lambda i: (0, 0)),       # (C, 3C)
            pl.BlockSpec(kp['wproj'].shape, lambda i: (0, 0)),      # (C, C)
            pl.BlockSpec(kp['wf1'].shape, lambda i: (0, 0)),        # (C, 4C)
            pl.BlockSpec(kp['wf2'].shape, lambda i: (0, 0)),        # (4C, C)
            pl.BlockSpec(kp['vecs'].shape, lambda i: (0, 0)),       # (6, C)
            pl.BlockSpec(kp['bf1'].shape, lambda i: (0, 0)),        # (1, 4C)
            pl.BlockSpec((2, R, A_W), lambda i: (0, i, 0)),         # cos/sin
            pl.BlockSpec((R, R), lambda i: (0, 0)),                 # mask bias
        ],
        out_specs=pl.BlockSpec((R, C), lambda i: (i, 0)),
        compiler_params=pltpu.CompilerParams(
            dimension_semantics=("parallel",)),
    )(x2, kp['wqkv'], kp['wproj'], kp['wf1'], kp['wf2'],
      kp['vecs'], kp['bf1'], kp['rope'], bias)

    return out2.reshape(B, T, C)


# -------------------------- parameter preparation ---------------------------

def init_params(key):
    """Raw, torch-like parameters (f32), consumed directly by the reference."""
    ks = jax.random.split(key, 12)
    std = 0.02

    def w(k, shape):
        return std * jax.random.normal(k, shape, jnp.float32)

    return dict(
        wq=w(ks[0], (N_HEAD, N_EMBD, HEAD_SIZE)),
        wk=w(ks[1], (N_HEAD, N_EMBD, HEAD_SIZE)),
        wv=w(ks[2], (N_HEAD, N_EMBD, HEAD_SIZE)),
        wproj=w(ks[3], (N_EMBD, N_EMBD)),
        bproj=0.02 * jax.random.normal(ks[4], (N_EMBD,), jnp.float32),
        g1=1.0 + 0.1 * jax.random.normal(ks[5], (N_EMBD,), jnp.float32),
        b1=0.1 * jax.random.normal(ks[6], (N_EMBD,), jnp.float32),
        g2=1.0 + 0.1 * jax.random.normal(ks[7], (N_EMBD,), jnp.float32),
        b2=0.1 * jax.random.normal(ks[8], (N_EMBD,), jnp.float32),
        wf1=w(ks[9], (N_EMBD, 4 * N_EMBD)),
        bf1=0.02 * jax.random.normal(ks[10], (4 * N_EMBD,), jnp.float32),
        wf2=w(ks[11], (4 * N_EMBD, N_EMBD)),
        bf2=jnp.zeros((N_EMBD,), jnp.float32),
    )


def prepare_kernel_params(p, T, B):
    """Offline weight transforms:
       - split q/k columns into 'real' (even) / 'imag' (odd) halves and lay
         them out as contiguous blocks [a0|a1|b0|b1] (exact RoPE rewrite that
         makes in-kernel RoPE pure elementwise),
       - fold 1/sqrt(hs) into q weights (f32, then cast),
       - fuse q/k/v into one (C, 3C) matrix,
       - pack small vectors, build batch-tiled cos/sin tables,
       - cast matmul weights to bf16 (f32 accumulation in the kernel)."""
    hs = HEAD_SIZE
    even = jnp.arange(0, hs, 2)
    odd = jnp.arange(1, hs, 2)
    scale = hs ** -0.5

    wq = p['wq'] * scale                       # (H, C, hs) f32, scale in f32
    wk = p['wk']
    wv = p['wv']

    qa = jnp.concatenate([wq[h][:, even] for h in range(N_HEAD)], axis=1)
    qb = jnp.concatenate([wq[h][:, odd] for h in range(N_HEAD)], axis=1)
    ka = jnp.concatenate([wk[h][:, even] for h in range(N_HEAD)], axis=1)
    kb = jnp.concatenate([wk[h][:, odd] for h in range(N_HEAD)], axis=1)
    vv = jnp.concatenate([wv[h] for h in range(N_HEAD)], axis=1)
    wqkv = jnp.concatenate([qa, qb, ka, kb, vv], axis=1)        # (C, 3C)

    # cos/sin tables: lanes = [head0 freqs | head1 freqs], rows tiled over B
    i = jnp.arange(0, hs, 2, dtype=jnp.float32)
    theta = 1.0 / (10000.0 ** (i / hs))
    freqs = jnp.outer(jnp.arange(T, dtype=jnp.float32), theta)  # (T, hs/2)
    cos = jnp.tile(jnp.cos(freqs), (B, N_HEAD))                 # (B*T, C/2)
    sin = jnp.tile(jnp.sin(freqs), (B, N_HEAD))                 # (B*T, C/2)

    vecs = jnp.stack([p['g1'], p['b1'], p['g2'], p['b2'],
                      p['bproj'], p['bf2']])                    # (6, C)

    return dict(
        wqkv=wqkv.astype(jnp.bfloat16),
        wproj=p['wproj'].astype(jnp.bfloat16),
        wf1=p['wf1'].astype(jnp.bfloat16),
        wf2=p['wf2'].astype(jnp.bfloat16),
        vecs=vecs.astype(jnp.float32),
        bf1=p['bf1'].reshape(1, -1).astype(jnp.float32),
        rope=jnp.stack([cos, sin]).astype(jnp.float32),         # (2, B*T, C/2)
    )


# ------------------------------ plain-JAX reference -------------------------

def _rope_ref(x, T, hs):
    i = jnp.arange(0, hs, 2, dtype=jnp.float32)
    theta = 1.0 / (10000.0 ** (i / hs))
    freqs = jnp.outer(jnp.arange(T, dtype=jnp.float32), theta)
    cos, sin = jnp.cos(freqs), jnp.sin(freqs)
    xr = x.reshape(*x.shape[:-1], hs // 2, 2)
    x0, x1 = xr[..., 0], xr[..., 1]
    o0 = x0 * cos - x1 * sin
    o1 = x0 * sin + x1 * cos
    return jnp.stack([o0, o1], axis=-1).reshape(x.shape)


def block_ref(x, p):
    def ln(v, g, b):
        mu = v.mean(-1, keepdims=True)
        var = ((v - mu) ** 2).mean(-1, keepdims=True)
        return (v - mu) / jnp.sqrt(var + LN_EPS) * g + b

    B, T, C = x.shape
    h = ln(x, p['g1'], p['b1'])
    outs = []
    for hd in range(N_HEAD):
        q = h @ p['wq'][hd]
        k = h @ p['wk'][hd]
        v = h @ p['wv'][hd]
        q = _rope_ref(q, T, HEAD_SIZE)
        k = _rope_ref(k, T, HEAD_SIZE)
        w = jnp.einsum('btd,bsd->bts', q, k) * (HEAD_SIZE ** -0.5)
        mask = jnp.tril(jnp.ones((T, T), bool))
        w = jnp.where(mask, w, -jnp.inf)
        w = jax.nn.softmax(w, -1)
        outs.append(jnp.einsum('bts,bsd->btd', w, v))
    cat = jnp.concatenate(outs, -1)
    x = x + cat @ p['wproj'] + p['bproj']
    h2 = ln(x, p['g2'], p['b2'])
    ff = jnp.maximum(h2 @ p['wf1'] + p['bf1'], 0.0) @ p['wf2'] + p['bf2']
    return x + ff


# ----------------------------------- main -----------------------------------

if __name__ == "__main__":
    B, T = 2, 8          # T <= block_size (16)
    key = jax.random.PRNGKey(0)
    kx, kparam = jax.random.split(key)
    x = jax.random.normal(kx, (B, T, N_EMBD), jnp.float32)

    params = init_params(kparam)
    kparams = prepare_kernel_params(params, T, B)

    out = jax.jit(block_forward)(x, kparams)
    out = jax.block_until_ready(out)

    ref = block_ref(x, params)
    assert out.shape == (B, T, N_EMBD)
    # bf16 matmul inputs + approx reciprocal in the kernel vs. full-f32 ref.
    max_err = float(jnp.max(jnp.abs(out - ref)))
    assert jnp.allclose(out, ref, rtol=1e-2, atol=1e-2), \
        f"kernel/reference mismatch (max abs err {max_err})"

    print("KERNEL_OK")
</pallas_src>

<mosaic_0001>
module attributes {stable_mosaic.version = 11 : i64} {
  func.func @_block_kernel(%arg0: i32, %arg1: memref<16x32xf32, #tpu.memory_space<vmem>>, %arg2: memref<32x96xbf16, #tpu.memory_space<vmem>>, %arg3: memref<32x32xbf16, #tpu.memory_space<vmem>>, %arg4: memref<32x128xbf16, #tpu.memory_space<vmem>>, %arg5: memref<128x32xbf16, #tpu.memory_space<vmem>>, %arg6: memref<6x32xf32, #tpu.memory_space<vmem>>, %arg7: memref<1x128xf32, #tpu.memory_space<vmem>>, %arg8: memref<2x16x16xf32, #tpu.memory_space<vmem>>, %arg9: memref<16x16xf32, #tpu.memory_space<vmem>>, %arg10: memref<16x32xf32, #tpu.memory_space<vmem>>) attributes {dimension_semantics = [#tpu.dimension_semantics<parallel>], iteration_bounds = array<i64: 1>, scalar_prefetch = 0 : i64, scratch_operands = 0 : i64, tpu.core_type = #tpu.core_type<tc>, window_params = [{transform_indices = @transform_0, window_bounds = array<i64: 16, 32>}, {pipeline_mode = #tpu.pipeline_mode<synchronous>, transform_indices = @transform_1, window_bounds = array<i64: 32, 96>}, {pipeline_mode = #tpu.pipeline_mode<synchronous>, transform_indices = @transform_2, window_bounds = array<i64: 32, 32>}, {pipeline_mode = #tpu.pipeline_mode<synchronous>, transform_indices = @transform_3, window_bounds = array<i64: 32, 128>}, {pipeline_mode = #tpu.pipeline_mode<synchronous>, transform_indices = @transform_4, window_bounds = array<i64: 128, 32>}, {pipeline_mode = #tpu.pipeline_mode<synchronous>, transform_indices = @transform_5, window_bounds = array<i64: 6, 32>}, {pipeline_mode = #tpu.pipeline_mode<synchronous>, transform_indices = @transform_6, window_bounds = array<i64: 1, 128>}, {transform_indices = @transform_7, window_bounds = array<i64: 2, 16, 16>}, {pipeline_mode = #tpu.pipeline_mode<synchronous>, transform_indices = @transform_8, window_bounds = array<i64: 16, 16>}, {transform_indices = @transform_9, window_bounds = array<i64: 16, 32>}]} {
    %c0 = arith.constant 0 : index
    %c0_0 = arith.constant 0 : index
    %0 = vector.load %arg1[%c0, %c0_0] : memref<16x32xf32, #tpu.memory_space<vmem>>, vector<16x32xf32>
    %c0_1 = arith.constant 0 : index
    %c0_2 = arith.constant 0 : index
    %1 = vector.load %arg6[%c0_1, %c0_2] : memref<6x32xf32, #tpu.memory_space<vmem>>, vector<6x32xf32>
    %2 = vector.extract_strided_slice %1 {offsets = [0, 0], sizes = [1, 32], strides = [1, 1]} : vector<6x32xf32> to vector<1x32xf32>
    %3 = vector.extract_strided_slice %1 {offsets = [1, 0], sizes = [1, 32], strides = [1, 1]} : vector<6x32xf32> to vector<1x32xf32>
    %4 = vector.extract_strided_slice %1 {offsets = [2, 0], sizes = [1, 32], strides = [1, 1]} : vector<6x32xf32> to vector<1x32xf32>
    %5 = vector.extract_strided_slice %1 {offsets = [3, 0], sizes = [1, 32], strides = [1, 1]} : vector<6x32xf32> to vector<1x32xf32>
    %6 = vector.extract_strided_slice %1 {offsets = [4, 0], sizes = [1, 32], strides = [1, 1]} : vector<6x32xf32> to vector<1x32xf32>
    %7 = vector.extract_strided_slice %1 {offsets = [5, 0], sizes = [1, 32], strides = [1, 1]} : vector<6x32xf32> to vector<1x32xf32>
    %cst = arith.constant dense<0.000000e+00> : vector<16xf32>
    %8 = vector.multi_reduction <add>, %0, %cst [1] : vector<16x32xf32> to vector<16xf32>
    %9 = vector.shape_cast %8 : vector<16xf32> to vector<16x1xf32>
    %cst_3 = arith.constant 3.200000e+01 : f32
    %10 = vector.broadcast %cst_3 : f32 to vector<16x1xf32>
    %11 = arith.divf %9, %10 : vector<16x1xf32>
    %12 = vector.broadcast %11 : vector<16x1xf32> to vector<16x32xf32>
    %13 = arith.subf %0, %12 : vector<16x32xf32>
    %14 = arith.mulf %13, %13 : vector<16x32xf32>
    %cst_4 = arith.constant dense<0.000000e+00> : vector<16xf32>
    %15 = vector.multi_reduction <add>, %14, %cst_4 [1] : vector<16x32xf32> to vector<16xf32>
    %16 = vector.shape_cast %15 : vector<16xf32> to vector<16x1xf32>
    %cst_5 = arith.constant 3.200000e+01 : f32
    %17 = vector.broadcast %cst_5 : f32 to vector<16x1xf32>
    %18 = arith.divf %16, %17 : vector<16x1xf32>
    %19 = vector.broadcast %11 : vector<16x1xf32> to vector<16x32xf32>
    %20 = arith.subf %0, %19 : vector<16x32xf32>
    %cst_6 = arith.constant 9.99999974E-6 : f32
    %21 = vector.broadcast %cst_6 : f32 to vector<16x1xf32>
    %22 = arith.addf %18, %21 : vector<16x1xf32>
    %23 = math.rsqrt %22 : vector<16x1xf32>
    %24 = vector.broadcast %23 : vector<16x1xf32> to vector<16x32xf32>
    %25 = arith.mulf %20, %24 : vector<16x32xf32>
    %26 = vector.broadcast %2 : vector<1x32xf32> to vector<16x32xf32>
    %27 = arith.mulf %25, %26 : vector<16x32xf32>
    %28 = vector.broadcast %3 : vector<1x32xf32> to vector<16x32xf32>
    %29 = arith.addf %27, %28 : vector<16x32xf32>
    %30 = arith.truncf %29 : vector<16x32xf32> to vector<16x32xbf16>
    %c0_7 = arith.constant 0 : index
    %c0_8 = arith.constant 0 : index
    %31 = vector.load %arg2[%c0_7, %c0_8] : memref<32x96xbf16, #tpu.memory_space<vmem>>, vector<32x96xbf16>
    %cst_9 = arith.constant dense<0.000000e+00> : vector<16x96xf32>
    %32 = tpu.matmul %30, %31, %cst_9 {dimension_numbers = #tpu.dot_dimension_numbers<[1], [0], [0], [1], [0, 0, 1, 1], [], []>} : vector<16x32xbf16>, vector<32x96xbf16>, vector<16x96xf32> -> vector<16x96xf32>
    %33 = vector.extract_strided_slice %32 {offsets = [0, 0], sizes = [16, 16], strides = [1, 1]} : vector<16x96xf32> to vector<16x16xf32>
    %34 = vector.extract_strided_slice %32 {offsets = [0, 16], sizes = [16, 16], strides = [1, 1]} : vector<16x96xf32> to vector<16x16xf32>
    %35 = vector.extract_strided_slice %32 {offsets = [0, 32], sizes = [16, 16], strides = [1, 1]} : vector<16x96xf32> to vector<16x16xf32>
    %36 = vector.extract_strided_slice %32 {offsets = [0, 48], sizes = [16, 16], strides = [1, 1]} : vector<16x96xf32> to vector<16x16xf32>
    %37 = vector.extract_strided_slice %32 {offsets = [0, 64], sizes = [16, 32], strides = [1, 1]} : vector<16x96xf32> to vector<16x32xf32>
    %c0_10 = arith.constant 0 : index
    %c0_11 = arith.constant 0 : index
    %c0_12 = arith.constant 0 : index
    %38 = vector.load %arg8[%c0_10, %c0_11, %c0_12] : memref<2x16x16xf32, #tpu.memory_space<vmem>>, vector<1x16x16xf32>
    %39 = vector.shape_cast %38 : vector<1x16x16xf32> to vector<16x16xf32>
    %c1 = arith.constant 1 : index
    %c0_13 = arith.constant 0 : index
    %c0_14 = arith.constant 0 : index
    %40 = vector.load %arg8[%c1, %c0_13, %c0_14] : memref<2x16x16xf32, #tpu.memory_space<vmem>>, vector<1x16x16xf32>
    %41 = vector.shape_cast %40 : vector<1x16x16xf32> to vector<16x16xf32>
    %42 = arith.mulf %33, %39 : vector<16x16xf32>
    %43 = arith.mulf %34, %41 : vector<16x16xf32>
    %44 = arith.subf %42, %43 : vector<16x16xf32>
    %45 = arith.mulf %34, %39 : vector<16x16xf32>
    %46 = arith.mulf %33, %41 : vector<16x16xf32>
    %47 = arith.addf %45, %46 : vector<16x16xf32>
    %48 = arith.mulf %35, %39 : vector<16x16xf32>
    %49 = arith.mulf %36, %41 : vector<16x16xf32>
    %50 = arith.subf %48, %49 : vector<16x16xf32>
    %51 = arith.mulf %36, %39 : vector<16x16xf32>
    %52 = arith.mulf %35, %41 : vector<16x16xf32>
    %53 = arith.addf %51, %52 : vector<16x16xf32>
    %c0_15 = arith.constant 0 : index
    %c0_16 = arith.constant 0 : index
    %54 = vector.load %arg9[%c0_15, %c0_16] : memref<16x16xf32, #tpu.memory_space<vmem>>, vector<16x16xf32>
    %55 = vector.extract_strided_slice %44 {offsets = [0, 0], sizes = [16, 8], strides = [1, 1]} : vector<16x16xf32> to vector<16x8xf32>
    %56 = arith.truncf %55 : vector<16x8xf32> to vector<16x8xbf16>
    %57 = vector.extract_strided_slice %50 {offsets = [0, 0], sizes = [16, 8], strides = [1, 1]} : vector<16x16xf32> to vector<16x8xf32>
    %58 = arith.truncf %57 : vector<16x8xf32> to vector<16x8xbf16>
    %cst_17 = arith.constant dense<0.000000e+00> : vector<16x16xf32>
    %59 = tpu.matmul %56, %58, %cst_17 {dimension_numbers = #tpu.dot_dimension_numbers<[1], [1], [0], [0], [0, 0, 1, 0], [], []>} : vector<16x8xbf16>, vector<16x8xbf16>, vector<16x16xf32> -> vector<16x16xf32>
    %60 = vector.extract_strided_slice %47 {offsets = [0, 0], sizes = [16, 8], strides = [1, 1]} : vector<16x16xf32> to vector<16x8xf32>
    %61 = arith.truncf %60 : vector<16x8xf32> to vector<16x8xbf16>
    %62 = vector.extract_strided_slice %53 {offsets = [0, 0], sizes = [16, 8], strides = [1, 1]} : vector<16x16xf32> to vector<16x8xf32>
    %63 = arith.truncf %62 : vector<16x8xf32> to vector<16x8xbf16>
    %cst_18 = arith.constant dense<0.000000e+00> : vector<16x16xf32>
    %64 = tpu.matmul %61, %63, %cst_18 {dimension_numbers = #tpu.dot_dimension_numbers<[1], [1], [0], [0], [0, 0, 1, 0], [], []>} : vector<16x8xbf16>, vector<16x8xbf16>, vector<16x16xf32> -> vector<16x16xf32>
    %65 = arith.addf %59, %64 : vector<16x16xf32>
    %66 = arith.addf %65, %54 : vector<16x16xf32>
    %cst_19 = arith.constant dense<0xFF800000> : vector<16xf32>
    %67 = vector.multi_reduction <maximumf>, %66, %cst_19 [1] : vector<16x16xf32> to vector<16xf32>
    %68 = vector.shape_cast %67 : vector<16xf32> to vector<16x1xf32>
    %69 = vector.broadcast %68 : vector<16x1xf32> to vector<16x16xf32>
    %70 = arith.subf %66, %69 : vector<16x16xf32>
    %71 = math.exp %70 : vector<16x16xf32>
    %cst_20 = arith.constant dense<0.000000e+00> : vector<16xf32>
    %72 = vector.multi_reduction <add>, %71, %cst_20 [1] : vector<16x16xf32> to vector<16xf32>
    %73 = vector.shape_cast %72 : vector<16xf32> to vector<16x1xf32>
    %74 = tpu.reciprocal %73 {approx = true} : vector<16x1xf32> -> vector<16x1xf32>
    %75 = vector.broadcast %74 : vector<16x1xf32> to vector<16x16xf32>
    %76 = arith.mulf %71, %75 : vector<16x16xf32>
    %77 = arith.truncf %76 : vector<16x16xf32> to vector<16x16xbf16>
    %78 = vector.extract_strided_slice %37 {offsets = [0, 0], sizes = [16, 16], strides = [1, 1]} : vector<16x32xf32> to vector<16x16xf32>
    %79 = arith.truncf %78 : vector<16x16xf32> to vector<16x16xbf16>
    %cst_21 = arith.constant dense<0.000000e+00> : vector<16x16xf32>
    %80 = tpu.matmul %77, %79, %cst_21 {dimension_numbers = #tpu.dot_dimension_numbers<[1], [0], [0], [1], [0, 0, 1, 1], [], []>} : vector<16x16xbf16>, vector<16x16xbf16>, vector<16x16xf32> -> vector<16x16xf32>
    %81 = arith.truncf %80 : vector<16x16xf32> to vector<16x16xbf16>
    %c0_22 = arith.constant 0 : index
    %c0_23 = arith.constant 0 : index
    %82 = vector.load %arg3[%c0_22, %c0_23] : memref<32x32xbf16, #tpu.memory_space<vmem>>, vector<16x32xbf16>
    %cst_24 = arith.constant dense<0.000000e+00> : vector<16x32xf32>
    %83 = tpu.matmul %81, %82, %cst_24 {dimension_numbers = #tpu.dot_dimension_numbers<[1], [0], [0], [1], [0, 0, 1, 1], [], []>} : vector<16x16xbf16>, vector<16x32xbf16>, vector<16x32xf32> -> vector<16x32xf32>
    %84 = vector.extract_strided_slice %44 {offsets = [0, 8], sizes = [16, 8], strides = [1, 1]} : vector<16x16xf32> to vector<16x8xf32>
    %85 = arith.truncf %84 : vector<16x8xf32> to vector<16x8xbf16>
    %86 = vector.extract_strided_slice %50 {offsets = [0, 8], sizes = [16, 8], strides = [1, 1]} : vector<16x16xf32> to vector<16x8xf32>
    %87 = arith.truncf %86 : vector<16x8xf32> to vector<16x8xbf16>
    %cst_25 = arith.constant dense<0.000000e+00> : vector<16x16xf32>
    %88 = tpu.matmul %85, %87, %cst_25 {dimension_numbers = #tpu.dot_dimension_numbers<[1], [1], [0], [0], [0, 0, 1, 0], [], []>} : vector<16x8xbf16>, vector<16x8xbf16>, vector<16x16xf32> -> vector<16x16xf32>
    %89 = vector.extract_strided_slice %47 {offsets = [0, 8], sizes = [16, 8], strides = [1, 1]} : vector<16x16xf32> to vector<16x8xf32>
    %90 = arith.truncf %89 : vector<16x8xf32> to vector<16x8xbf16>
    %91 = vector.extract_strided_slice %53 {offsets = [0, 8], sizes = [16, 8], strides = [1, 1]} : vector<16x16xf32> to vector<16x8xf32>
    %92 = arith.truncf %91 : vector<16x8xf32> to vector<16x8xbf16>
    %cst_26 = arith.constant dense<0.000000e+00> : vector<16x16xf32>
    %93 = tpu.matmul %90, %92, %cst_26 {dimension_numbers = #tpu.dot_dimension_numbers<[1], [1], [0], [0], [0, 0, 1, 0], [], []>} : vector<16x8xbf16>, vector<16x8xbf16>, vector<16x16xf32> -> vector<16x16xf32>
    %94 = arith.addf %88, %93 : vector<16x16xf32>
    %95 = arith.addf %94, %54 : vector<16x16xf32>
    %cst_27 = arith.constant dense<0xFF800000> : vector<16xf32>
    %96 = vector.multi_reduction <maximumf>, %95, %cst_27 [1] : vector<16x16xf32> to vector<16xf32>
    %97 = vector.shape_cast %96 : vector<16xf32> to vector<16x1xf32>
    %98 = vector.broadcast %97 : vector<16x1xf32> to vector<16x16xf32>
    %99 = arith.subf %95, %98 : vector<16x16xf32>
    %100 = math.exp %99 : vector<16x16xf32>
    %cst_28 = arith.constant dense<0.000000e+00> : vector<16xf32>
    %101 = vector.multi_reduction <add>, %100, %cst_28 [1] : vector<16x16xf32> to vector<16xf32>
    %102 = vector.shape_cast %101 : vector<16xf32> to vector<16x1xf32>
    %103 = tpu.reciprocal %102 {approx = true} : vector<16x1xf32> -> vector<16x1xf32>
    %104 = vector.broadcast %103 : vector<16x1xf32> to vector<16x16xf32>
    %105 = arith.mulf %100, %104 : vector<16x16xf32>
    %106 = arith.truncf %105 : vector<16x16xf32> to vector<16x16xbf16>
    %107 = vector.extract_strided_slice %37 {offsets = [0, 16], sizes = [16, 16], strides = [1, 1]} : vector<16x32xf32> to vector<16x16xf32>
    %108 = arith.truncf %107 : vector<16x16xf32> to vector<16x16xbf16>
    %cst_29 = arith.constant dense<0.000000e+00> : vector<16x16xf32>
    %109 = tpu.matmul %106, %108, %cst_29 {dimension_numbers = #tpu.dot_dimension_numbers<[1], [0], [0], [1], [0, 0, 1, 1], [], []>} : vector<16x16xbf16>, vector<16x16xbf16>, vector<16x16xf32> -> vector<16x16xf32>
    %110 = arith.truncf %109 : vector<16x16xf32> to vector<16x16xbf16>
    %c16 = arith.constant 16 : index
    %c0_30 = arith.constant 0 : index
    %111 = vector.load %arg3[%c16, %c0_30] : memref<32x32xbf16, #tpu.memory_space<vmem>>, vector<16x32xbf16>
    %cst_31 = arith.constant dense<0.000000e+00> : vector<16x32xf32>
    %112 = tpu.matmul %110, %111, %cst_31 {dimension_numbers = #tpu.dot_dimension_numbers<[1], [0], [0], [1], [0, 0, 1, 1], [], []>} : vector<16x16xbf16>, vector<16x32xbf16>, vector<16x32xf32> -> vector<16x32xf32>
    %113 = arith.addf %83, %112 : vector<16x32xf32>
    %114 = arith.addf %0, %113 : vector<16x32xf32>
    %115 = vector.broadcast %6 : vector<1x32xf32> to vector<16x32xf32>
    %116 = arith.addf %114, %115 : vector<16x32xf32>
    %cst_32 = arith.constant dense<0.000000e+00> : vector<16xf32>
    %117 = vector.multi_reduction <add>, %116, %cst_32 [1] : vector<16x32xf32> to vector<16xf32>
    %118 = vector.shape_cast %117 : vector<16xf32> to vector<16x1xf32>
    %cst_33 = arith.constant 3.200000e+01 : f32
    %119 = vector.broadcast %cst_33 : f32 to vector<16x1xf32>
    %120 = arith.divf %118, %119 : vector<16x1xf32>
    %121 = vector.broadcast %120 : vector<16x1xf32> to vector<16x32xf32>
    %122 = arith.subf %116, %121 : vector<16x32xf32>
    %123 = arith.mulf %122, %122 : vector<16x32xf32>
    %cst_34 = arith.constant dense<0.000000e+00> : vector<16xf32>
    %124 = vector.multi_reduction <add>, %123, %cst_34 [1] : vector<16x32xf32> to vector<16xf32>
    %125 = vector.shape_cast %124 : vector<16xf32> to vector<16x1xf32>
    %cst_35 = arith.constant 3.200000e+01 : f32
    %126 = vector.broadcast %cst_35 : f32 to vector<16x1xf32>
    %127 = arith.divf %125, %126 : vector<16x1xf32>
    %128 = vector.broadcast %120 : vector<16x1xf32> to vector<16x32xf32>
    %129 = arith.subf %116, %128 : vector<16x32xf32>
    %cst_36 = arith.constant 9.99999974E-6 : f32
    %130 = vector.broadcast %cst_36 : f32 to vector<16x1xf32>
    %131 = arith.addf %127, %130 : vector<16x1xf32>
    %132 = math.rsqrt %131 : vector<16x1xf32>
    %133 = vector.broadcast %132 : vector<16x1xf32> to vector<16x32xf32>
    %134 = arith.mulf %129, %133 : vector<16x32xf32>
    %135 = vector.broadcast %4 : vector<1x32xf32> to vector<16x32xf32>
    %136 = arith.mulf %134, %135 : vector<16x32xf32>
    %137 = vector.broadcast %5 : vector<1x32xf32> to vector<16x32xf32>
    %138 = arith.addf %136, %137 : vector<16x32xf32>
    %139 = arith.truncf %138 : vector<16x32xf32> to vector<16x32xbf16>
    %c0_37 = arith.constant 0 : index
    %c0_38 = arith.constant 0 : index
    %140 = vector.load %arg4[%c0_37, %c0_38] : memref<32x128xbf16, #tpu.memory_space<vmem>>, vector<32x128xbf16>
    %cst_39 = arith.constant dense<0.000000e+00> : vector<16x128xf32>
    %141 = tpu.matmul %139, %140, %cst_39 {dimension_numbers = #tpu.dot_dimension_numbers<[1], [0], [0], [1], [0, 0, 1, 1], [], []>} : vector<16x32xbf16>, vector<32x128xbf16>, vector<16x128xf32> -> vector<16x128xf32>
    %c0_40 = arith.constant 0 : index
    %c0_41 = arith.constant 0 : index
    %142 = vector.load %arg7[%c0_40, %c0_41] : memref<1x128xf32, #tpu.memory_space<vmem>>, vector<1x128xf32>
    %143 = vector.broadcast %142 : vector<1x128xf32> to vector<16x128xf32>
    %144 = arith.addf %141, %143 : vector<16x128xf32>
    %cst_42 = arith.constant 0.000000e+00 : f32
    %145 = vector.broadcast %cst_42 : f32 to vector<16x128xf32>
    %146 = arith.maximumf %144, %145 : vector<16x128xf32>
    %147 = arith.truncf %146 : vector<16x128xf32> to vector<16x128xbf16>
    %c0_43 = arith.constant 0 : index
    %c0_44 = arith.constant 0 : index
    %148 = vector.load %arg5[%c0_43, %c0_44] : memref<128x32xbf16, #tpu.memory_space<vmem>>, vector<128x32xbf16>
    %cst_45 = arith.constant dense<0.000000e+00> : vector<16x32xf32>
    %149 = tpu.matmul %147, %148, %cst_45 {dimension_numbers = #tpu.dot_dimension_numbers<[1], [0], [0], [1], [0, 0, 1, 1], [], []>} : vector<16x128xbf16>, vector<128x32xbf16>, vector<16x32xf32> -> vector<16x32xf32>
    %150 = arith.addf %116, %149 : vector<16x32xf32>
    %151 = vector.broadcast %7 : vector<1x32xf32> to vector<16x32xf32>
    %152 = arith.addf %150, %151 : vector<16x32xf32>
    %c0_46 = arith.constant 0 : index
    %c0_47 = arith.constant 0 : index
    %153 = vector.load %arg10[%c0_46, %c0_47] : memref<16x32xf32, #tpu.memory_space<vmem>>, vector<16x32xf32>
    tpu.vector_store %arg10[%c0_46, %c0_47], %152 {strides = array<i32>} : memref<16x32xf32, #tpu.memory_space<vmem>>, vector<16x32xf32>,
    return
  }
  func.func @transform_0(%arg0: i32) -> (i32, i32) {
    %c0_i32 = arith.constant 0 : i32
    %c0_i32_0 = arith.constant 0 : i32
    return %arg0, %c0_i32 : i32, i32
  }
  func.func @transform_1(%arg0: i32) -> (i32, i32) {
    %c0_i32 = arith.constant 0 : i32
    %c0_i32_0 = arith.constant 0 : i32
    %c0_i32_1 = arith.constant 0 : i32
    return %c0_i32, %c0_i32_0 : i32, i32
  }
  func.func @transform_2(%arg0: i32) -> (i32, i32) {
    %c0_i32 = arith.constant 0 : i32
    %c0_i32_0 = arith.constant 0 : i32
    %c0_i32_1 = arith.constant 0 : i32
    return %c0_i32, %c0_i32_0 : i32, i32
  }
  func.func @transform_3(%arg0: i32) -> (i32, i32) {
    %c0_i32 = arith.constant 0 : i32
    %c0_i32_0 = arith.constant 0 : i32
    %c0_i32_1 = arith.constant 0 : i32
    return %c0_i32, %c0_i32_0 : i32, i32
  }
  func.func @transform_4(%arg0: i32) -> (i32, i32) {
    %c0_i32 = arith.constant 0 : i32
    %c0_i32_0 = arith.constant 0 : i32
    %c0_i32_1 = arith.constant 0 : i32
    return %c0_i32, %c0_i32_0 : i32, i32
  }
  func.func @transform_5(%arg0: i32) -> (i32, i32) {
    %c0_i32 = arith.constant 0 : i32
    %c0_i32_0 = arith.constant 0 : i32
    %c0_i32_1 = arith.constant 0 : i32
    return %c0_i32, %c0_i32_0 : i32, i32
  }
  func.func @transform_6(%arg0: i32) -> (i32, i32) {
    %c0_i32 = arith.constant 0 : i32
    %c0_i32_0 = arith.constant 0 : i32
    %c0_i32_1 = arith.constant 0 : i32
    return %c0_i32, %c0_i32_0 : i32, i32
  }
  func.func @transform_7(%arg0: i32) -> (i32, i32, i32) {
    %c0_i32 = arith.constant 0 : i32
    %c0_i32_0 = arith.constant 0 : i32
    %c0_i32_1 = arith.constant 0 : i32
    return %c0_i32, %arg0, %c0_i32_0 : i32, i32, i32
  }
  func.func @transform_8(%arg0: i32) -> (i32, i32) {
    %c0_i32 = arith.constant 0 : i32
    %c0_i32_0 = arith.constant 0 : i32
    %c0_i32_1 = arith.constant 0 : i32
    return %c0_i32, %c0_i32_0 : i32, i32
  }
  func.func @transform_9(%arg0: i32) -> (i32, i32) {
    %c0_i32 = arith.constant 0 : i32
    %c0_i32_0 = arith.constant 0 : i32
    return %arg0, %c0_i32 : i32, i32
  }
}

</mosaic_0001>

<llo_original>
// kernel: block_forward.1
$region0: #{block_forward.1}
  #allocation0 [shape = 'u32[]', space=smem, size = 0x4, offset = 0x4, fixed_abs, tag = 'smem constant byte address 0x4 - core index']
  #allocation1 [shape = 'u32[72,128]{1,0:T(1,128)}', space=vmem, size = 0x9000, scoped, tag = 'internal scratch']
  %s0 = inlined_call_operand.vmem [shape: f32[16,32], index: 0, kind: input, shape index: {}]
  %s1 = inlined_call_operand.vmem [shape: bf16[32,96], index: 1, kind: input, shape index: {}]
  %s2 = inlined_call_operand.vmem [shape: bf16[32,32], index: 2, kind: input, shape index: {}]
  %s3 = inlined_call_operand.hbm [shape: bf16[32,128], index: 3, kind: input, shape index: {}]
  %s4 = inlined_call_operand.vmem [shape: bf16[128,32], index: 4, kind: input, shape index: {}]
  %s5 = inlined_call_operand.vmem [shape: f32[6,32], index: 5, kind: input, shape index: {}]
  %s6 = inlined_call_operand.hbm [shape: f32[1,128], index: 6, kind: input, shape index: {}]
  %s7 = inlined_call_operand.vmem [shape: f32[2,16,16], index: 7, kind: input, shape index: {}]
  %s8 = inlined_call_operand.vmem [shape: f32[16,16], index: 8, kind: input, shape index: {}]
  %s9 = inlined_call_operand.hbm [shape: f32[16,32], index: 9, kind: output, shape index: {}]
  %s10 = sld [smem:[#allocation0]]
  $region54: #{block_forward.1} parent=0
    _
  %s12 = ssub.s32 1, %s10
  %s13 = scalar_select 0, %s12, %s10
  $region1: #{block_forward.1} parent=0
    #allocation2 [shape = 'u8[8192]{0}', space=vmem, size = 0x2000, scoped, tag = 'input window, operand 3, single buffered']
    #allocation3 [shape = 's32[1]{0}', space=sflag, size = 0x4, scoped, tag = 'scoped memory for block_forward.1']
    #allocation4 [shape = 's32[1]{0}', space=sflag, size = 0x4, scoped, tag = 'scoped memory for block_forward.1']
    #allocation5 [shape = 'u8[512]{0}', space=vmem, size = 0x400, scoped, tag = 'input window, operand 6, single buffered']
    #allocation6 [shape = 's32[1]{0}', space=sflag, size = 0x4, scoped, tag = 'scoped memory for block_forward.1']
    #allocation7 [shape = 'u8[8192]{0}', space=vmem, size = 0x2000, scoped, tag = 'output window, operand 0, single buffered']
    %14 = vsyncpa [#allocation3], 0
    %15 = vsyncpa [#allocation6], 0
    %16 = vsyncpa [#allocation4], 0
    // Predicated region
    $region2: #{block_forward.1} parent=1 // pred_check
      _
    $region3: #{block_forward.1} parent=1 // pred_check_branch
      %18 = sbr.rel (0) target = $region5
    $region4: #{block_forward.1} parent=1 // pred_region
      _
    $region5: #{block_forward.1} parent=1 // pred_fallthru
      _
    // Predicated region
    $region6: #{block_forward.1} parent=1 // pred_check
      _
    $region7: #{block_forward.1} parent=1 // pred_check_branch
      %20 = sbr.rel (0) target = $region9
    $region8: #{block_forward.1} parent=1 // pred_region
      _
    $region9: #{block_forward.1} parent=1 // pred_fallthru
      _
    // Predicated region
    $region10: #{block_forward.1} parent=1 // pred_check
      _
    $region11: #{block_forward.1} parent=1 // pred_check_branch
      %22 = sbr.rel (0) target = $region13
    $region12: #{block_forward.1} parent=1 // pred_region
      _
    $region13: #{block_forward.1} parent=1 // pred_fallthru
      _
    // Predicated region
    $region14: #{block_forward.1} parent=1 // pred_check
      _
    $region15: #{block_forward.1} parent=1 // pred_check_branch
      %24 = sbr.rel (0) target = $region17
    $region16: #{block_forward.1} parent=1 // pred_region
      %26 = vsyncadd [#allocation3], 0
      %s27 = sshll.u32 %s3, 4
      %s28 = int_to_ptr.hbm [resolvable:$true] %s27
      %s29 = sshll.u32 [#allocation2], 4
      %s30 = int_to_ptr.vmem [resolvable:$true] %s29
      %35 = dma.hbm_to_vmem [thread:$0]  %s28, 256, %s30, [#allocation3], 64, 64, 4
    $region17: #{block_forward.1} parent=1 // pred_fallthru
      _
    // Predicated region
    $region18: #{block_forward.1} parent=1 // pred_check
      _
    $region19: #{block_forward.1} parent=1 // pred_check_branch
      %37 = sbr.rel (0) target = $region21
    $region20: #{block_forward.1} parent=1 // pred_region
      _
    $region21: #{block_forward.1} parent=1 // pred_fallthru
      _
    // Predicated region
    $region22: #{block_forward.1} parent=1 // pred_check
      _
    $region23: #{block_forward.1} parent=1 // pred_check_branch
      %39 = sbr.rel (0) target = $region25
    $region24: #{block_forward.1} parent=1 // pred_region
      _
    $region25: #{block_forward.1} parent=1 // pred_fallthru
      _
    // Predicated region
    $region26: #{block_forward.1} parent=1 // pred_check
      _
    $region27: #{block_forward.1} parent=1 // pred_check_branch
      %41 = sbr.rel (0) target = $region29
    $region28: #{block_forward.1} parent=1 // pred_region
      %43 = vsyncadd [#allocation6], 0
      %s45 = sshll.u32 %s6, 4
      %s46 = int_to_ptr.hbm [resolvable:$true] %s45
      %s47 = sshll.u32 [#allocation5], 4
      %s48 = int_to_ptr.vmem [resolvable:$true] %s47
      %50 = dma.hbm_to_vmem [thread:$0]  %s46, 16, %s48, [#allocation6]
    $region29: #{block_forward.1} parent=1 // pred_fallthru
      _
    // Predicated region
    $region30: #{block_forward.1} parent=1 // pred_check
      _
    $region31: #{block_forward.1} parent=1 // pred_check_branch
      %52 = sbr.rel (0) target = $region33
    $region32: #{block_forward.1} parent=1 // pred_region
      _
    $region33: #{block_forward.1} parent=1 // pred_fallthru
      _
    // Predicated region
    $region34: #{block_forward.1} parent=1 // pred_check
      _
    $region35: #{block_forward.1} parent=1 // pred_check_branch
      %54 = sbr.rel (0) target = $region37
    $region36: #{block_forward.1} parent=1 // pred_region
      _
    $region37: #{block_forward.1} parent=1 // pred_fallthru
      _
    // Predicated region
    $region38: #{block_forward.1} parent=1 // pred_check
      _
    $region39: #{block_forward.1} parent=1 // pred_check_branch
      %56 = sbr.rel (0) target = $region41
    $region40: #{block_forward.1} parent=1 // pred_region
      %58 = dma.done [#allocation3], 256
    $region41: #{block_forward.1} parent=1 // pred_fallthru
      _
    // Predicated region
    $region42: #{block_forward.1} parent=1 // pred_check
      _
    $region43: #{block_forward.1} parent=1 // pred_check_branch
      %60 = sbr.rel (0) target = $region45
    $region44: #{block_forward.1} parent=1 // pred_region
      %62 = dma.done [#allocation6], 16
    $region45: #{block_forward.1} parent=1 // pred_fallthru
      _
    %v64 = vld [vmem:[%s0] sm:$0xff]
    %v65 = vld [vmem:[%s0 + $0x8] sm:$0xff]
    %v66 = vld [vmem:[%s5] sm:$0x3f]
    %vm67 = vcmask 261120
    %v68 = vsel %vm67, %v64, 0.0
    %69 = vadd.xlane.f32.xlu0 %v68
    %v70 = vpop.xlane.xlu0 %69
    %v71 = vsel %vm67, %v65, 0.0
    %72 = vadd.xlane.f32.xlu0 %v71
    %v73 = vpop.xlane.xlu0 %72
    %v74 = vrcp.pop 32.0
    %v75 = vmul.f32 32.0, %v74
    %v76 = vsub.f32 1.0, %v75
    %v77 = vmul.f32 %v74, %v76
    %v78 = vadd.f32 %v74, %v77
    %vm79 = vweird.f32 %v74
    %v80 = vsel %vm79, %v74, %v78
    %v81 = vmul.f32 %v70, %v80
    %v82 = vmul.f32 %v73, %v80
    %v83 = vsub.f32 %v64, %v81
    %v84 = vsub.f32 %v65, %v82
    %v85 = vmul.f32 %v83, %v83
    %v86 = vmul.f32 %v84, %v84
    %v87 = vsel %vm67, %v85, 0.0
    %88 = vadd.xlane.f32.xlu0 %v87
    %v89 = vpop.xlane.xlu0 %88
    %v90 = vsel %vm67, %v86, 0.0
    %91 = vadd.xlane.f32.xlu0 %v90
    %v92 = vpop.xlane.xlu0 %91
    %v93 = vmul.f32 %v89, %v80
    %v94 = vmul.f32 %v92, %v80
    %v95 = vadd.f32 %v93, 1e-05
    %v96 = vadd.f32 %v94, 1e-05
    %v97 = vrsqrt.pop %v95
    %v98 = vmul.f32 %v97, %v95
    %v99 = vmul.f32 %v98, %v97
    %v100 = vmul.f32 0.5, %v99
    %v101 = vsub.f32 1.5, %v100
    %v102 = vmul.f32 %v97, %v101
    %vm103 = vweird.f32 %v95
    %vm104 = vweird.f32 %v97
    %vm105 = vmor %vm103, %vm104
    %v106 = vsel %vm105, %v97, %v102
    %v107 = vrsqrt.pop %v96
    %v108 = vmul.f32 %v107, %v96
    %v109 = vmul.f32 %v108, %v107
    %v110 = vmul.f32 0.5, %v109
    %v111 = vsub.f32 1.5, %v110
    %v112 = vmul.f32 %v107, %v111
    %vm113 = vweird.f32 %v96
    %vm114 = vweird.f32 %v107
    %vm115 = vmor %vm113, %vm114
    %v116 = vsel %vm115, %v107, %v112
    %v117 = vmul.f32 %v83, %v106
    %v118 = vmul.f32 %v84, %v116
    %v119 = vperm.slane %v66, 0
    %v120 = vmul.f32 %v117, %v119
    %v121 = vmul.f32 %v118, %v119
    %v122 = vperm.slane %v66, 1
    %v123 = vadd.f32 %v120, %v122
    %v124 = vadd.f32 %v121, %v122
    %v125 = vpack.c.bf16 %v124, %v123
    %v126 = vld [vmem:[%s1] sm:$0xf]
    %v127 = vld [vmem:[%s1 + $0x4] sm:$0xf]
    %v128 = vld [vmem:[%s1 + $0x8] sm:$0xf]
    %v129 = vld [vmem:[%s1 + $0xc] sm:$0xf]
    %v134 = vunpack.c.l.b16 %v126
    %v135 = vunpack.c.l.b16 %v127
    %v136 = vunpack.c.l.b16 %v128
    %v137 = vunpack.c.l.b16 %v129
    %v138 = vpack.c.b16 %v135, %v134
    %v139 = vpack.c.b16 %v137, %v136
    %v143 = vsel %vm67, %v125, 0
    %145 = vmatpush.bf16.msra.mxu0 0
    %146 = vmatpush.bf16.msra.mxu0 0
    %147 = vmatpush.bf16.msra.mxu0 0
    %148 = vmatpush.bf16.msra.mxu0 0
    %149 = vmatpush.bf16.msra.mxu0 0
    %150 = vmatpush.bf16.msra.mxu0 0
    %151 = vmatpush.bf16.msra.mxu0 %v139
    %152 = vmatpush.bf16.msra.mxu0 %v138
    %153 = vmatmul.bf16.gmra.mxu0 %v143
    %v154 = vpop.f32.mrf.mxu0
    %v155 = vadd.f32 0.0, %v154
    %v156 = vpop.f32.mrf.mxu0
    %v157 = vadd.f32 0.0, %v156
    %158 = vdwg.mxu0
    %v159 = vld [vmem:[%s7] sm:$0xff]
    %v160 = vld [vmem:[%s7 + $0x8] sm:$0xff]
    %s161 = scalar_lea.vmem %s7, 16
    %v162 = vld [vmem:[%s161] sm:$0xff]
    %v163 = vld [vmem:[%s161 + $0x8] sm:$0xff]
    %v164 = vmul.f32 %v155, %v159
    %v165 = vmul.f32 %v157, %v160
    %168 = vrot.lane.b32.xlu0 %v162, 16
    %v169 = vpop.permute.xlu0 %168
    %170 = vrot.lane.b32.xlu0 %v163, 16
    %v171 = vpop.permute.xlu0 %170
    %v174 = vmul.f32 %v155, %v169
    %v175 = vmul.f32 %v157, %v171
    %178 = vrot.lane.b32.xlu0 %v174, 112
    %v179 = vpop.permute.xlu0 %178
    %180 = vrot.lane.b32.xlu0 %v175, 112
    %v181 = vpop.permute.xlu0 %180
    %v184 = vsub.f32 %v164, %v179
    %v185 = vsub.f32 %v165, %v181
    %188 = vrot.lane.b32.xlu0 %v159, 16
    %v189 = vpop.permute.xlu0 %188
    %190 = vrot.lane.b32.xlu0 %v160, 16
    %v191 = vpop.permute.xlu0 %190
    %v194 = vmul.f32 %v155, %v189
    %v195 = vmul.f32 %v157, %v191
    %v196 = vmul.f32 %v155, %v162
    %v197 = vmul.f32 %v157, %v163
    %200 = vrot.lane.b32.xlu0 %v196, 16
    %v201 = vpop.permute.xlu0 %200
    %202 = vrot.lane.b32.xlu0 %v197, 16
    %v203 = vpop.permute.xlu0 %202
    %v206 = vadd.f32 %v194, %v201
    %v207 = vadd.f32 %v195, %v203
    %208 = vrot.lane.b32.xlu0 %v159, 32
    %v209 = vpop.permute.xlu0 %208
    %210 = vrot.lane.b32.xlu0 %v160, 32
    %v211 = vpop.permute.xlu0 %210
    %v214 = vmul.f32 %v155, %v209
    %v215 = vmul.f32 %v157, %v211
    %216 = vrot.lane.b32.xlu0 %v162, 48
    %v217 = vpop.permute.xlu0 %216
    %218 = vrot.lane.b32.xlu0 %v163, 48
    %v219 = vpop.permute.xlu0 %218
    %v222 = vmul.f32 %v155, %v217
    %v223 = vmul.f32 %v157, %v219
    %226 = vrot.lane.b32.xlu0 %v222, 112
    %v227 = vpop.permute.xlu0 %226
    %228 = vrot.lane.b32.xlu0 %v223, 112
    %v229 = vpop.permute.xlu0 %228
    %v232 = vsub.f32 %v214, %v227
    %v233 = vsub.f32 %v215, %v229
    %234 = vrot.lane.b32.xlu0 %v159, 48
    %v235 = vpop.permute.xlu0 %234
    %236 = vrot.lane.b32.xlu0 %v160, 48
    %v237 = vpop.permute.xlu0 %236
    %v240 = vmul.f32 %v155, %v235
    %v241 = vmul.f32 %v157, %v237
    %242 = vrot.lane.b32.xlu0 %v162, 32
    %v243 = vpop.permute.xlu0 %242
    %244 = vrot.lane.b32.xlu0 %v163, 32
    %v245 = vpop.permute.xlu0 %244
    %v248 = vmul.f32 %v155, %v243
    %v249 = vmul.f32 %v157, %v245
    %252 = vrot.lane.b32.xlu0 %v248, 16
    %v253 = vpop.permute.xlu0 %252
    %254 = vrot.lane.b32.xlu0 %v249, 16
    %v255 = vpop.permute.xlu0 %254
    %v258 = vadd.f32 %v240, %v253
    %v259 = vadd.f32 %v241, %v255
    %v260 = vld [vmem:[%s8] sm:$0xff]
    %v261 = vld [vmem:[%s8 + $0x8] sm:$0xff]
    %v262 = vpack.c.bf16 %v185, %v184
    %v263 = vpack.c.bf16 %v233, %v232
    %v264 = vpack.c.bf16 %v207, %v206
    %v265 = vpack.c.bf16 %v259, %v258
    %267 = vrot.lane.b32.xlu0 %v264, 112
    %v268 = vpop.permute.xlu0 %267
    %270 = vrot.lane.b32.xlu0 %v265, 80
    %v271 = vpop.permute.xlu0 %270
    %vm272 = vcmask 64512
    %v274 = vsel %vm272, %v268, 0
    %v277 = vsel %vm272, %v271, 0
    %279 = vmatpush.bf16.xpose.msra.mxu0 0
    %280 = vmatpush.bf16.xpose.msra.mxu0 0
    %281 = vmatpush.bf16.xpose.msra.mxu0 0
    %282 = vmatpush.bf16.xpose.msra.mxu0 0
    %283 = vmatpush.bf16.xpose.msra.mxu0 0
    %284 = vmatpush.bf16.xpose.msra.mxu0 0
    %285 = vmatpush.bf16.xpose.msra.mxu0 0
    %286 = vmatpush.bf16.xpose.msra.mxu0 %v277
    %287 = vmatmul.bf16.gmra.mxu0 %v274
    %v288 = vpop.f32.mrf.mxu0
    %v289 = vadd.f32 0.0, %v288
    %v290 = vpop.f32.mrf.mxu0
    %v291 = vadd.f32 0.0, %v290
    %292 = vdwg.mxu0
    %294 = vrot.lane.b32.xlu0 %v263, 96
    %v295 = vpop.permute.xlu0 %294
    %v297 = vsel %vm272, %v262, 0
    %v300 = vsel %vm272, %v295, 0
    %302 = vmatpush.bf16.xpose.msra.mxu0 0
    %303 = vmatpush.bf16.xpose.msra.mxu0 0
    %304 = vmatpush.bf16.xpose.msra.mxu0 0
    %305 = vmatpush.bf16.xpose.msra.mxu0 0
    %306 = vmatpush.bf16.xpose.msra.mxu0 0
    %307 = vmatpush.bf16.xpose.msra.mxu0 0
    %308 = vmatpush.bf16.xpose.msra.mxu0 0
    %309 = vmatpush.bf16.xpose.msra.mxu0 %v300
    %310 = vmatmul.bf16.gmra.mxu0 %v297
    %v311 = vpop.f32.mrf.mxu0
    %v312 = vadd.f32 %v289, %v311
    %v313 = vpop.f32.mrf.mxu0
    %v314 = vadd.f32 %v291, %v313
    %315 = vdwg.mxu0
    %v316 = vadd.f32 %v312, %v260
    %v317 = vadd.f32 %v314, %v261
    %vm318 = vcmask 130048
    %v319 = vsel %vm318, %v316, -inf
    %320 = vmax.xlane.f32.xlu0 %v319
    %v321 = vpop.xlane.xlu0 %320
    %v322 = vsel %vm318, %v317, -inf
    %323 = vmax.xlane.f32.xlu0 %v322
    %v324 = vpop.xlane.xlu0 %323
    %v325 = vsub.f32 %v316, %v321
    %v326 = vsub.f32 %v317, %v324
    %v327 = vmul.f32 %v325, 1.442695
    %v328 = vpow.pop %v327
    %v329 = vmul.f32 %v326, 1.442695
    %v330 = vpow.pop %v329
    %v331 = vsel %vm318, %v328, 0.0
    %332 = vadd.xlane.f32.xlu0 %v331
    %v333 = vpop.xlane.xlu0 %332
    %v334 = vsel %vm318, %v330, 0.0
    %335 = vadd.xlane.f32.xlu0 %v334
    %v336 = vpop.xlane.xlu0 %335
    %v337 = vrcp.pop %v333
    %v338 = vrcp.pop %v336
    %v339 = vmul.f32 %v328, %v337
    %v340 = vmul.f32 %v330, %v338
    %v341 = vpack.c.bf16 %v340, %v339
    %v342 = vpack.c.bf16 %v157, %v155
    %344 = vrot.lane.b32.xlu0 %v342, 64
    %v345 = vpop.permute.xlu0 %344
    %v348 = vsel %vm318, %v341, 0
    %350 = vmatpush.bf16.msra.mxu0 0
    %351 = vmatpush.bf16.msra.mxu0 0
    %352 = vmatpush.bf16.msra.mxu0 0
    %353 = vmatpush.bf16.msra.mxu0 0
    %354 = vmatpush.bf16.msra.mxu0 0
    %355 = vmatpush.bf16.msra.mxu0 0
    %356 = vmatpush.bf16.msra.mxu0 0
    %357 = vmatpush.bf16.msra.mxu0 %v345
    %358 = vmatmul.bf16.gmra.mxu0 %v348
    %v359 = vpop.f32.mrf.mxu0
    %v360 = vadd.f32 0.0, %v359
    %v361 = vpop.f32.mrf.mxu0
    %v362 = vadd.f32 0.0, %v361
    %363 = vdwg.mxu0
    %v364 = vpack.c.bf16 %v362, %v360
    %v365 = vld [vmem:[%s2] sm:$0xf]
    %v366 = vld [vmem:[%s2 + $0x4] sm:$0xf]
    %367 = vrot.lane.b32.xlu0 %v264, 104
    %v368 = vpop.permute.xlu0 %367
    %369 = vrot.lane.b32.xlu0 %v265, 72
    %v370 = vpop.permute.xlu0 %369
    %v372 = vsel %vm272, %v368, 0
    %v375 = vsel %vm272, %v370, 0
    %377 = vmatpush.bf16.xpose.msra.mxu0 0
    %378 = vmatpush.bf16.xpose.msra.mxu0 0
    %379 = vmatpush.bf16.xpose.msra.mxu0 0
    %380 = vmatpush.bf16.xpose.msra.mxu0 0
    %381 = vmatpush.bf16.xpose.msra.mxu0 0
    %382 = vmatpush.bf16.xpose.msra.mxu0 0
    %383 = vmatpush.bf16.xpose.msra.mxu0 0
    %384 = vmatpush.bf16.xpose.msra.mxu0 %v375
    %385 = vmatmul.bf16.gmra.mxu0 %v372
    %v386 = vpop.f32.mrf.mxu0
    %v387 = vadd.f32 0.0, %v386
    %v388 = vpop.f32.mrf.mxu0
    %v389 = vadd.f32 0.0, %v388
    %390 = vdwg.mxu0
    %392 = vrot.lane.b32.xlu0 %v262, 120
    %v393 = vpop.permute.xlu0 %392
    %394 = vrot.lane.b32.xlu0 %v263, 88
    %v395 = vpop.permute.xlu0 %394
    %v397 = vsel %vm272, %v393, 0
    %v400 = vsel %vm272, %v395, 0
    %402 = vmatpush.bf16.xpose.msra.mxu0 0
    %403 = vmatpush.bf16.xpose.msra.mxu0 0
    %404 = vmatpush.bf16.xpose.msra.mxu0 0
    %405 = vmatpush.bf16.xpose.msra.mxu0 0
    %406 = vmatpush.bf16.xpose.msra.mxu0 0
    %407 = vmatpush.bf16.xpose.msra.mxu0 0
    %408 = vmatpush.bf16.xpose.msra.mxu0 0
    %409 = vmatpush.bf16.xpose.msra.mxu0 %v400
    %410 = vmatmul.bf16.gmra.mxu0 %v397
    %v411 = vpop.f32.mrf.mxu0
    %v412 = vadd.f32 %v387, %v411
    %v413 = vpop.f32.mrf.mxu0
    %v414 = vadd.f32 %v389, %v413
    %415 = vdwg.mxu0
    %v416 = vadd.f32 %v412, %v260
    %v417 = vadd.f32 %v414, %v261
    %v418 = vsel %vm318, %v416, -inf
    %419 = vmax.xlane.f32.xlu0 %v418
    %v420 = vpop.xlane.xlu0 %419
    %v421 = vsel %vm318, %v417, -inf
    %422 = vmax.xlane.f32.xlu0 %v421
    %v423 = vpop.xlane.xlu0 %422
    %v424 = vsub.f32 %v416, %v420
    %v425 = vsub.f32 %v417, %v423
    %v426 = vmul.f32 %v424, 1.442695
    %v427 = vpow.pop %v426
    %v428 = vmul.f32 %v425, 1.442695
    %v429 = vpow.pop %v428
    %v430 = vsel %vm318, %v427, 0.0
    %431 = vadd.xlane.f32.xlu0 %v430
    %v432 = vpop.xlane.xlu0 %431
    %v433 = vsel %vm318, %v429, 0.0
    %434 = vadd.xlane.f32.xlu0 %v433
    %v435 = vpop.xlane.xlu0 %434
    %v436 = vrcp.pop %v432
    %v437 = vrcp.pop %v435
    %v438 = vmul.f32 %v427, %v436
    %v439 = vmul.f32 %v429, %v437
    %v440 = vpack.c.bf16 %v439, %v438
    %441 = vrot.lane.b32.xlu0 %v342, 48
    %v442 = vpop.permute.xlu0 %441
    %v445 = vsel %vm318, %v440, 0
    %447 = vmatpush.bf16.msra.mxu0 0
    %448 = vmatpush.bf16.msra.mxu0 0
    %449 = vmatpush.bf16.msra.mxu0 0
    %450 = vmatpush.bf16.msra.mxu0 0
    %451 = vmatpush.bf16.msra.mxu0 0
    %452 = vmatpush.bf16.msra.mxu0 0
    %453 = vmatpush.bf16.msra.mxu0 0
    %454 = vmatpush.bf16.msra.mxu0 %v442
    %455 = vmatmul.bf16.gmra.mxu0 %v445
    %v456 = vpop.f32.mrf.mxu0
    %v457 = vadd.f32 0.0, %v456
    %v458 = vpop.f32.mrf.mxu0
    %v459 = vadd.f32 0.0, %v458
    %460 = vdwg.mxu0
    %v461 = vpack.c.bf16 %v459, %v457
    %v462 = vld [vmem:[%s2 + $0x8] sm:$0xf]
    %v463 = vld [vmem:[%s2 + $0xc] sm:$0xf]
    %v466 = vunpack.c.l.b16 %v462
    %v467 = vunpack.c.l.b16 %v463
    %v468 = vpack.c.b16 %v467, %v466
    %v471 = vsel %vm318, %v461, 0
    %473 = vmatpush.bf16.msra.mxu0 0
    %474 = vmatpush.bf16.msra.mxu0 0
    %475 = vmatpush.bf16.msra.mxu0 0
    %476 = vmatpush.bf16.msra.mxu0 0
    %477 = vmatpush.bf16.msra.mxu0 0
    %478 = vmatpush.bf16.msra.mxu0 0
    %479 = vmatpush.bf16.msra.mxu0 0
    %480 = vmatpush.bf16.msra.mxu0 %v468
    %481 = vmatmul.bf16.gmra.mxu0 %v471
    %v482 = vpop.f32.mrf.mxu0
    %v483 = vadd.f32 0.0, %v482
    %v484 = vpop.f32.mrf.mxu0
    %v485 = vadd.f32 0.0, %v484
    %486 = vdwg.mxu0
    %v489 = vunpack.c.l.b16 %v365
    %v490 = vunpack.c.l.b16 %v366
    %v491 = vpack.c.b16 %v490, %v489
    %v494 = vsel %vm318, %v364, 0
    %496 = vmatpush.bf16.msra.mxu0 0
    %497 = vmatpush.bf16.msra.mxu0 0
    %498 = vmatpush.bf16.msra.mxu0 0
    %499 = vmatpush.bf16.msra.mxu0 0
    %500 = vmatpush.bf16.msra.mxu0 0
    %501 = vmatpush.bf16.msra.mxu0 0
    %502 = vmatpush.bf16.msra.mxu0 0
    %503 = vmatpush.bf16.msra.mxu0 %v491
    %504 = vmatmul.bf16.gmra.mxu0 %v494
    %v505 = vpop.f32.mrf.mxu0
    %v506 = vadd.f32 %v483, %v505
    %v507 = vpop.f32.mrf.mxu0
    %v508 = vadd.f32 %v485, %v507
    %509 = vdwg.mxu0
    %v510 = vadd.f32 %v64, %v506
    %v511 = vadd.f32 %v65, %v508
    %v512 = vperm.slane %v66, 4
    %v513 = vadd.f32 %v510, %v512
    %v514 = vadd.f32 %v511, %v512
    %v515 = vsel %vm67, %v513, 0.0
    %516 = vadd.xlane.f32.xlu0 %v515
    %v517 = vpop.xlane.xlu0 %516
    %v518 = vsel %vm67, %v514, 0.0
    %519 = vadd.xlane.f32.xlu0 %v518
    %v520 = vpop.xlane.xlu0 %519
    %v521 = vmul.f32 %v517, %v80
    %v522 = vmul.f32 %v520, %v80
    %v523 = vsub.f32 %v513, %v521
    %v524 = vsub.f32 %v514, %v522
    %v525 = vmul.f32 %v523, %v523
    %v526 = vmul.f32 %v524, %v524
    %v527 = vsel %vm67, %v525, 0.0
    %528 = vadd.xlane.f32.xlu0 %v527
    %v529 = vpop.xlane.xlu0 %528
    %v530 = vsel %vm67, %v526, 0.0
    %531 = vadd.xlane.f32.xlu0 %v530
    %v532 = vpop.xlane.xlu0 %531
    %v533 = vmul.f32 %v529, %v80
    %v534 = vmul.f32 %v532, %v80
    %v535 = vadd.f32 %v533, 1e-05
    %v536 = vadd.f32 %v534, 1e-05
    %v537 = vrsqrt.pop %v535
    %v538 = vmul.f32 %v537, %v535
    %v539 = vmul.f32 %v538, %v537
    %v540 = vmul.f32 0.5, %v539
    %v541 = vsub.f32 1.5, %v540
    %v542 = vmul.f32 %v537, %v541
    %vm543 = vweird.f32 %v535
    %vm544 = vweird.f32 %v537
    %vm545 = vmor %vm543, %vm544
    %v546 = vsel %vm545, %v537, %v542
    %v547 = vrsqrt.pop %v536
    %v548 = vmul.f32 %v547, %v536
    %v549 = vmul.f32 %v548, %v547
    %v550 = vmul.f32 0.5, %v549
    %v551 = vsub.f32 1.5, %v550
    %v552 = vmul.f32 %v547, %v551
    %vm553 = vweird.f32 %v536
    %vm554 = vweird.f32 %v547
    %vm555 = vmor %vm553, %vm554
    %v556 = vsel %vm555, %v547, %v552
    %v557 = vmul.f32 %v523, %v546
    %v558 = vmul.f32 %v524, %v556
    %v559 = vperm.slane %v66, 2
    %v560 = vmul.f32 %v557, %v559
    %v561 = vmul.f32 %v558, %v559
    %v562 = vperm.slane %v66, 3
    %v563 = vadd.f32 %v560, %v562
    %v564 = vadd.f32 %v561, %v562
    %v565 = vpack.c.bf16 %v564, %v563
    %v566 = vld [vmem:[#allocation2] sm:$0xf]
    %v567 = vld [vmem:[#allocation2 + $0x4] sm:$0xf]
    %v568 = vld [vmem:[#allocation2 + $0x8] sm:$0xf]
    %v569 = vld [vmem:[#allocation2 + $0xc] sm:$0xf]
    %v570 = vld [vmem:[#allocation5] sm:$0x1]
    %v572 = vperm.slane %v570, 0
    %v578 = vunpack.c.l.b16 %v566
    %v579 = vunpack.c.l.b16 %v567
    %v580 = vunpack.c.l.b16 %v568
    %v581 = vunpack.c.l.b16 %v569
    %v582 = vpack.c.b16 %v579, %v578
    %v583 = vpack.c.b16 %v581, %v580
    %v587 = vsel %vm67, %v565, 0
    %589 = vmatpush.bf16.msra.mxu0 0
    %590 = vmatpush.bf16.msra.mxu0 0
    %591 = vmatpush.bf16.msra.mxu0 0
    %592 = vmatpush.bf16.msra.mxu0 0
    %593 = vmatpush.bf16.msra.mxu0 0
    %594 = vmatpush.bf16.msra.mxu0 0
    %595 = vmatpush.bf16.msra.mxu0 %v583
    %596 = vmatpush.bf16.msra.mxu0 %v582
    %597 = vmatmul.bf16.gmra.mxu0 %v587
    %v598 = vpop.f32.mrf.mxu0
    %v599 = vadd.f32 %v572, %v598
    %v600 = vpop.f32.mrf.mxu0
    %v601 = vadd.f32 %v572, %v600
    %602 = vdwg.mxu0
    %v603 = vmax.f32 %v599, 0.0
    %v604 = vmax.f32 %v601, 0.0
    %v605 = vpack.c.bf16 %v604, %v603
    %v606 = vld [vmem:[%s4] sm:$0xf]
    %v607 = vld [vmem:[%s4 + $0x4] sm:$0xf]
    %v608 = vld [vmem:[%s4 + $0x8] sm:$0xf]
    %v609 = vld [vmem:[%s4 + $0xc] sm:$0xf]
    %v610 = vld [vmem:[%s4 + $0x10] sm:$0xf]
    %v611 = vld [vmem:[%s4 + $0x14] sm:$0xf]
    %v612 = vld [vmem:[%s4 + $0x18] sm:$0xf]
    %v613 = vld [vmem:[%s4 + $0x1c] sm:$0xf]
    %v614 = vld [vmem:[%s4 + $0x20] sm:$0xf]
    %v615 = vld [vmem:[%s4 + $0x24] sm:$0xf]
    %v616 = vld [vmem:[%s4 + $0x28] sm:$0xf]
    %v617 = vld [vmem:[%s4 + $0x2c] sm:$0xf]
    %v618 = vld [vmem:[%s4 + $0x30] sm:$0xf]
    %v619 = vld [vmem:[%s4 + $0x34] sm:$0xf]
    %v620 = vld [vmem:[%s4 + $0x38] sm:$0xf]
    %v621 = vld [vmem:[%s4 + $0x3c] sm:$0xf]
    %v638 = vunpack.c.l.b16 %v606
    %v639 = vunpack.c.l.b16 %v607
    %v640 = vunpack.c.l.b16 %v608
    %v641 = vunpack.c.l.b16 %v609
    %v642 = vunpack.c.l.b16 %v610
    %v643 = vunpack.c.l.b16 %v611
    %v644 = vunpack.c.l.b16 %v612
    %v645 = vunpack.c.l.b16 %v613
    %v646 = vunpack.c.l.b16 %v614
    %v647 = vunpack.c.l.b16 %v615
    %v648 = vunpack.c.l.b16 %v616
    %v649 = vunpack.c.l.b16 %v617
    %v650 = vunpack.c.l.b16 %v618
    %v651 = vunpack.c.l.b16 %v619
    %v652 = vunpack.c.l.b16 %v620
    %v653 = vunpack.c.l.b16 %v621
    %v654 = vpack.c.b16 %v639, %v638
    %v655 = vpack.c.b16 %v641, %v640
    %v656 = vpack.c.b16 %v643, %v642
    %v657 = vpack.c.b16 %v645, %v644
    %v658 = vpack.c.b16 %v647, %v646
    %v659 = vpack.c.b16 %v649, %v648
    %v660 = vpack.c.b16 %v651, %v650
    %v661 = vpack.c.b16 %v653, %v652
    %670 = vmatpush.bf16.msra.mxu0 %v661
    %671 = vmatpush.bf16.msra.mxu0 %v660
    %672 = vmatpush.bf16.msra.mxu0 %v659
    %673 = vmatpush.bf16.msra.mxu0 %v658
    %674 = vmatpush.bf16.msra.mxu0 %v657
    %675 = vmatpush.bf16.msra.mxu0 %v656
    %676 = vmatpush.bf16.msra.mxu0 %v655
    %677 = vmatpush.bf16.msra.mxu0 %v654
    %678 = vmatmul.bf16.gmra.mxu0 %v605
    %v679 = vpop.f32.mrf.mxu0
    %v680 = vadd.f32 0.0, %v679
    %v681 = vpop.f32.mrf.mxu0
    %v682 = vadd.f32 0.0, %v681
    %683 = vdwg.mxu0
    %v684 = vadd.f32 %v513, %v680
    %v685 = vadd.f32 %v514, %v682
    %v686 = vperm.slane %v66, 5
    %v687 = vadd.f32 %v684, %v686
    %v688 = vadd.f32 %v685, %v686
    %689 = vst.msk [vmem:[#allocation7] sm:$0xff] %vm67, %v687
    %690 = vst.msk [vmem:[#allocation7 + $0x8] sm:$0xff] %vm67, %v688
    // Predicated region
    $region46: #{block_forward.1} parent=1 // pred_check
      _
    $region47: #{block_forward.1} parent=1 // pred_check_branch
      %692 = sbr.rel (0) target = $region49
    $region48: #{block_forward.1} parent=1 // pred_region
      %694 = vsyncadd [#allocation4], 0
      %s695 = sshll.u32 [#allocation7], 4
      %s696 = int_to_ptr.vmem [resolvable:$true] %s695
      %s697 = sshll.u32 %s9, 4
      %s698 = int_to_ptr.hbm [resolvable:$true] %s697
      %703 = dma.vmem_to_hbm [thread:$0]  %s696, 256, %s698, [#allocation4], 128, 128, 8
    $region49: #{block_forward.1} parent=1 // pred_fallthru
      _
    // Predicated region
    $region50: #{block_forward.1} parent=1 // pred_check
      _
    $region51: #{block_forward.1} parent=1 // pred_check_branch
      %705 = sbr.rel (0) target = $region53
    $region52: #{block_forward.1} parent=1 // pred_region
      %707 = dma.done [#allocation4], 256
    $region53: #{block_forward.1} parent=1 // pred_fallthru
      _
    %708 = vsyncpa [#allocation3], 1
    %709 = vsyncpa [#allocation6], 1
    %710 = vsyncpa [#allocation4], 1

</llo_original>
